<compile_context>
chip_gen: v7x
topology: tpu7x:2x2x1
jax: 0.10.0
libtpu: 0.0.40
codegen_flags: <defaults>
</compile_context>

<pallas_src>
import functools

import jax
import jax.numpy as jnp
from jax.experimental import pallas as pl
from jax.experimental.pallas import tpu as pltpu

_SUBLANE = 8


def _round_up(x, m):
    return ((x + m - 1) // m) * m


def _vmem_limit_bytes():
    """Scoped-VMEM limit to request: ~3/4 of physical, capped for headroom."""
    try:
        cap = pltpu.get_tpu_info().vmem_capacity_bytes
    except Exception:
        cap = 64 * 1024 * 1024  # conservative default (v7x per-TC physical VMEM)
    return int(min(cap * 3 // 4, 100 * 1024 * 1024))


def _sublane_multiple(itemsize):
    # f32 tiles are (8,128); bf16 pack to (16,128); 8-bit to (32,128).
    return _SUBLANE * max(1, 4 // max(itemsize, 1))


def _choose_block_rows(n_rows, h, itemsize, vmem_limit, n_pipelined_bufs):
    """Row-tile size so the pipelined tiles use at most ~half the scoped VMEM
    limit; the other half is left for compiler temps / resident operands."""
    align = _sublane_multiple(itemsize)
    per_buf = (vmem_limit // 2) // max(n_pipelined_bufs, 1)
    tm = per_buf // max(h * itemsize, 1)
    tm = max(align, (tm // align) * align)
    return min(tm, _round_up(n_rows, align))


# ----------------------- fast path: whole problem resident -----------------------
def _fast_kernel(x_ref, c_ref, o_ref):
    x = x_ref[...].astype(jnp.float32)                 # (N, H)
    c = c_ref[...]                                     # (1, H) f32
    scores = jnp.sum(x * c, axis=1, keepdims=True)     # (N, 1)  VPU mul + XLU reduce
    m = jnp.max(scores, axis=0, keepdims=True)         # (1, 1)
    e = jnp.exp(scores - m)
    inv = pl.reciprocal(jnp.sum(e, axis=0, keepdims=True), approx=False)
    o_ref[...] = (x * (e * inv)).astype(o_ref.dtype)


# --------------------------- pass 1: softmax statistics ---------------------------
def _stats_kernel(x_ref, c_ref, m_ref, inv_ref, m_sc, s_sc, *, n_valid, block_rows):
    pid = pl.program_id(0)

    @pl.when(pid == 0)
    def _():
        m_sc[...] = jnp.full((1, 1), -jnp.inf, jnp.float32)
        s_sc[...] = jnp.zeros((1, 1), jnp.float32)

    x = x_ref[...].astype(jnp.float32)                 # (tm, H)
    c = c_ref[...]                                     # (1,  H) f32 (resident)
    scores = jnp.sum(x * c, axis=1, keepdims=True)     # (tm, 1)

    # Mask rows past the true sequence length (edge block rows read garbage).
    row = pid * block_rows + jax.lax.broadcasted_iota(jnp.int32, scores.shape, 0)
    scores = jnp.where(row < n_valid, scores, -jnp.inf)

    # Streaming (online) softmax statistics over the sequence axis.
    m_old = m_sc[...]
    m_new = jnp.maximum(m_old, jnp.max(scores, axis=0, keepdims=True))
    s_new = (s_sc[...] * jnp.exp(m_old - m_new)
             + jnp.sum(jnp.exp(scores - m_new), axis=0, keepdims=True))
    m_sc[...] = m_new
    s_sc[...] = s_new

    @pl.when(pid == pl.num_programs(0) - 1)
    def _():
        m_ref[...] = m_new
        inv_ref[...] = pl.reciprocal(s_new, approx=False)  # pass 2 only multiplies


# --------------------------- pass 2: normalize + weight ---------------------------
def _normalize_kernel(x_ref, c_ref, m_ref, inv_ref, o_ref):
    x = x_ref[...].astype(jnp.float32)                 # (tm, H)
    c = c_ref[...]                                     # (1,  H) f32
    scores = jnp.sum(x * c, axis=1, keepdims=True)     # (tm, 1)
    w = jnp.exp(scores - m_ref[...]) * inv_ref[...]    # softmax weights
    # OOB rows of an edge block produce garbage here, but Pallas discards the
    # out-of-bounds part of the store, so no masking is needed.
    o_ref[...] = (x * w).astype(o_ref.dtype)


def attention_layer_forward(x, context_vector, *, block_rows=None,
                            force_streaming=False):
    """x: (N, H), context_vector: (H,) -> (N, H), same dtype as x."""
    N, H = x.shape
    assert N >= 1, "empty sequence not supported"
    itemsize = jnp.dtype(x.dtype).itemsize
    vmem_limit = _vmem_limit_bytes()
    c2d = context_vector.astype(jnp.float32).reshape(1, H)

    # ---------------- fast path: whole x resident, single kernel ----------------
    if (not force_streaming and block_rows is None
            and N * H * 4 <= vmem_limit // 6):
        return pl.pallas_call(
            _fast_kernel,
            out_shape=jax.ShapeDtypeStruct((N, H), x.dtype),
            grid=(1,),
            in_specs=[pl.BlockSpec((N, H), lambda i: (0, 0)),
                      pl.BlockSpec((1, H), lambda i: (0, 0))],
            out_specs=pl.BlockSpec((N, H), lambda i: (0, 0)),
            compiler_params=pltpu.CompilerParams(vmem_limit_bytes=vmem_limit),
        )(x, c2d)

    # ------------- streaming path: two passes with online softmax stats -------------
    # Pass 1 pipelines only x (2 buffers) so it gets a ~2x larger tile than pass 2,
    # which pipelines x and the output (4 buffers).
    if block_rows is not None:
        align = _sublane_multiple(itemsize)
        tm1 = tm2 = max(align, (block_rows // align) * align)
    else:
        tm1 = _choose_block_rows(N, H, itemsize, vmem_limit, n_pipelined_bufs=2)
        tm2 = _choose_block_rows(N, H, itemsize, vmem_limit, n_pipelined_bufs=4)

    n1 = pl.cdiv(N, tm1)
    n2 = pl.cdiv(N, tm2)

    # ---- pass 1: global (max, 1/sum) over the sequence axis (reduction grid) ----
    stats_kernel = functools.partial(_stats_kernel, n_valid=N, block_rows=tm1)
    m_out, inv_out = pl.pallas_call(
        stats_kernel,
        out_shape=(jax.ShapeDtypeStruct((1, 1), jnp.float32),
                   jax.ShapeDtypeStruct((1, 1), jnp.float32)),
        grid_spec=pltpu.PrefetchScalarGridSpec(
            num_scalar_prefetch=0,
            grid=(n1,),
            in_specs=[
                pl.BlockSpec((tm1, H), lambda i: (i, 0)),
                pl.BlockSpec((1, H), lambda i: (0, 0)),    # context: resident
            ],
            out_specs=[
                pl.BlockSpec((1, 1), lambda i: (0, 0)),
                pl.BlockSpec((1, 1), lambda i: (0, 0)),
            ],
            scratch_shapes=[
                pltpu.VMEM((1, 1), jnp.float32),           # running max
                pltpu.VMEM((1, 1), jnp.float32),           # running sum
            ]),
        compiler_params=pltpu.CompilerParams(
            dimension_semantics=("arbitrary",),            # sequential reduction
            vmem_limit_bytes=vmem_limit),
    )(x, c2d)

    # ---- pass 2: normalize and weight (independent tiles -> "parallel") ----
    out = pl.pallas_call(
        _normalize_kernel,
        out_shape=jax.ShapeDtypeStruct((N, H), x.dtype),
        grid_spec=pltpu.PrefetchScalarGridSpec(
            num_scalar_prefetch=0,
            grid=(n2,),
            in_specs=[
                pl.BlockSpec((tm2, H), lambda i: (i, 0)),
                pl.BlockSpec((1, H), lambda i: (0, 0)),    # context: resident
                pl.BlockSpec((1, 1), lambda i: (0, 0)),    # max: resident
                pl.BlockSpec((1, 1), lambda i: (0, 0)),    # 1/sum: resident
            ],
            out_specs=pl.BlockSpec((tm2, H), lambda i: (i, 0))),
        compiler_params=pltpu.CompilerParams(
            dimension_semantics=("parallel",),             # shards over megacore TCs
            vmem_limit_bytes=vmem_limit),
    )(x, c2d, m_out, inv_out)

    return out


def reference_forward(x, context_vector):
    """Pure-JAX reference mirroring the PyTorch forward (computed in f32)."""
    xf = x.astype(jnp.float32)
    w = xf @ context_vector.astype(jnp.float32)        # (N,)
    w = jax.nn.softmax(w, axis=0)                      # softmax over dim 0
    return xf * w[:, None]


if __name__ == "__main__":
    key = jax.random.PRNGKey(0)
    k_x, k_ctx, k_x2, k_ctx2, k_x3, k_ctx3 = jax.random.split(key, 6)

    # Shapes implied by the module's forward: x is (seq, hidden), context (hidden,).
    seq, hidden_dim = 8, 32
    x = jax.random.normal(k_x, (seq, hidden_dim), dtype=jnp.float32)
    ctx = jax.random.uniform(k_ctx, (hidden_dim,), dtype=jnp.float32)

    # 1) Small shape -> resident-x fast path (single pallas_call).
    out = jax.block_until_ready(attention_layer_forward(x, ctx))
    ref = reference_forward(x, ctx)
    assert out.shape == (seq, hidden_dim)
    assert jnp.allclose(out, ref, atol=1e-5, rtol=1e-4), "mismatch (fast path)"

    # 2) Non-aligned shape, forced streaming path with explicit small tiles:
    #    exercises multi-tile online softmax, a partial edge block and row masking.
    seq2, hidden2 = 300, 96
    x2 = jax.random.normal(k_x2, (seq2, hidden2), dtype=jnp.float32)
    ctx2 = jax.random.uniform(k_ctx2, (hidden2,), dtype=jnp.float32)
    out2 = jax.block_until_ready(
        attention_layer_forward(x2, ctx2, block_rows=64, force_streaming=True))
    ref2 = reference_forward(x2, ctx2)
    assert out2.shape == (seq2, hidden2)
    assert jnp.allclose(out2, ref2, atol=1e-5, rtol=1e-4), "mismatch (streaming)"

    # 3) Streaming path with auto tile sizing (single tile here, edge-masked rows).
    out2b = jax.block_until_ready(
        attention_layer_forward(x2, ctx2, force_streaming=True))
    assert jnp.allclose(out2b, ref2, atol=1e-5, rtol=1e-4), "mismatch (auto stream)"

    # 4) bf16 input stays bf16 on the wire; math in f32, output in bf16.
    seq3, hidden3 = 256, 128
    x3 = jax.random.normal(k_x3, (seq3, hidden3), dtype=jnp.bfloat16)
    ctx3 = jax.random.uniform(k_ctx3, (hidden3,), dtype=jnp.float32)
    out3 = jax.block_until_ready(attention_layer_forward(x3, ctx3))
    ref3 = reference_forward(x3, ctx3)
    assert out3.dtype == jnp.bfloat16 and out3.shape == (seq3, hidden3)
    assert jnp.allclose(out3.astype(jnp.float32), ref3, atol=5e-2, rtol=5e-2), \
        "mismatch (bf16)"

    print("KERNEL_OK")
</pallas_src>

<mosaic_0001>
module attributes {stable_mosaic.version = 11 : i64} {
  func.func @_fast_kernel(%arg0: i32, %arg1: memref<8x32xf32, #tpu.memory_space<vmem>>, %arg2: memref<1x32xf32, #tpu.memory_space<vmem>>, %arg3: memref<8x32xf32, #tpu.memory_space<vmem>>) attributes {dimension_semantics = [#tpu.dimension_semantics<arbitrary>], iteration_bounds = array<i64: 1>, scalar_prefetch = 0 : i64, scratch_operands = 0 : i64, tpu.core_type = #tpu.core_type<tc>, window_params = [{pipeline_mode = #tpu.pipeline_mode<synchronous>, transform_indices = @transform_0, window_bounds = array<i64: 8, 32>}, {pipeline_mode = #tpu.pipeline_mode<synchronous>, transform_indices = @transform_1, window_bounds = array<i64: 1, 32>}, {pipeline_mode = #tpu.pipeline_mode<synchronous>, transform_indices = @transform_2, window_bounds = array<i64: 8, 32>}]} {
    %c0 = arith.constant 0 : index
    %c0_0 = arith.constant 0 : index
    %0 = vector.load %arg1[%c0, %c0_0] : memref<8x32xf32, #tpu.memory_space<vmem>>, vector<8x32xf32>
    %c0_1 = arith.constant 0 : index
    %c0_2 = arith.constant 0 : index
    %1 = vector.load %arg2[%c0_1, %c0_2] : memref<1x32xf32, #tpu.memory_space<vmem>>, vector<1x32xf32>
    %2 = vector.broadcast %1 : vector<1x32xf32> to vector<8x32xf32>
    %3 = arith.mulf %0, %2 : vector<8x32xf32>
    %cst = arith.constant dense<0.000000e+00> : vector<8xf32>
    %4 = vector.multi_reduction <add>, %3, %cst [1] : vector<8x32xf32> to vector<8xf32>
    %5 = vector.shape_cast %4 : vector<8xf32> to vector<8x1xf32>
    %cst_3 = arith.constant dense<0xFF800000> : vector<1xf32>
    %6 = vector.multi_reduction <maximumf>, %5, %cst_3 [0] : vector<8x1xf32> to vector<1xf32>
    %7 = vector.shape_cast %6 : vector<1xf32> to vector<1x1xf32>
    %8 = vector.broadcast %7 : vector<1x1xf32> to vector<8x1xf32>
    %9 = arith.subf %5, %8 : vector<8x1xf32>
    %10 = math.exp %9 : vector<8x1xf32>
    %cst_4 = arith.constant dense<0.000000e+00> : vector<1xf32>
    %11 = vector.multi_reduction <add>, %10, %cst_4 [0] : vector<8x1xf32> to vector<1xf32>
    %12 = vector.shape_cast %11 : vector<1xf32> to vector<1x1xf32>
    %13 = tpu.reciprocal %12 : vector<1x1xf32> -> vector<1x1xf32>
    %14 = vector.broadcast %13 : vector<1x1xf32> to vector<8x1xf32>
    %15 = arith.mulf %10, %14 : vector<8x1xf32>
    %16 = vector.broadcast %15 : vector<8x1xf32> to vector<8x32xf32>
    %17 = arith.mulf %0, %16 : vector<8x32xf32>
    %c0_5 = arith.constant 0 : index
    %c0_6 = arith.constant 0 : index
    %18 = vector.load %arg3[%c0_5, %c0_6] : memref<8x32xf32, #tpu.memory_space<vmem>>, vector<8x32xf32>
    tpu.vector_store %arg3[%c0_5, %c0_6], %17 {strides = array<i32>} : memref<8x32xf32, #tpu.memory_space<vmem>>, vector<8x32xf32>,
    return
  }
  func.func @transform_0(%arg0: i32) -> (i32, i32) {
    %c0_i32 = arith.constant 0 : i32
    %c0_i32_0 = arith.constant 0 : i32
    %c0_i32_1 = arith.constant 0 : i32
    return %c0_i32, %c0_i32_0 : i32, i32
  }
  func.func @transform_1(%arg0: i32) -> (i32, i32) {
    %c0_i32 = arith.constant 0 : i32
    %c0_i32_0 = arith.constant 0 : i32
    %c0_i32_1 = arith.constant 0 : i32
    return %c0_i32, %c0_i32_0 : i32, i32
  }
  func.func @transform_2(%arg0: i32) -> (i32, i32) {
    %c0_i32 = arith.constant 0 : i32
    %c0_i32_0 = arith.constant 0 : i32
    %c0_i32_1 = arith.constant 0 : i32
    return %c0_i32, %c0_i32_0 : i32, i32
  }
}

</mosaic_0001>

<llo_original>
// kernel: tpu_custom_call.1
$region0: #{tpu_custom_call.1}
  #allocation0 [shape = 'u32[]', space=smem, size = 0x4, offset = 0x4, fixed_abs, tag = 'smem constant byte address 0x4 - core index']
  #allocation1 [shape = 'u32[144,128]{1,0:T(1,128)}', space=vmem, size = 0x12000, scoped, tag = 'internal scratch']
  %s0 = inlined_call_operand.hbm [shape: f32[8,32], index: 0, kind: input, shape index: {}]
  %s1 = inlined_call_operand.vmem [shape: f32[1,32], index: 1, kind: input, shape index: {}]
  %s2 = inlined_call_operand.hbm [shape: f32[8,32], index: 2, kind: output, shape index: {}]
  %s3 = sld [smem:[#allocation0]]
  $region22: #{tpu_custom_call.1} parent=0
    _
  %s5 = ssub.s32 1, %s3
  %s6 = scalar_select 0, %s5, %s3
  $region1: #{tpu_custom_call.1} parent=0
    #allocation2 [shape = 'u8[4096]{0}', space=vmem, size = 0x1000, scoped, tag = 'input window, operand 0, single buffered']
    #allocation3 [shape = 's32[1]{0}', space=sflag, size = 0x4, scoped, tag = 'scoped memory for tpu_custom_call.1']
    #allocation4 [shape = 's32[1]{0}', space=sflag, size = 0x4, scoped, tag = 'scoped memory for tpu_custom_call.1']
    #allocation5 [shape = 'u8[4096]{0}', space=vmem, size = 0x1000, scoped, tag = 'output window, operand 0, single buffered']
    %7 = vsyncpa [#allocation3], 0
    %8 = vsyncpa [#allocation4], 0
    // Predicated region
    $region2: #{tpu_custom_call.1} parent=1 // pred_check
      _
    $region3: #{tpu_custom_call.1} parent=1 // pred_check_branch
      %10 = sbr.rel (0) target = $region5
    $region4: #{tpu_custom_call.1} parent=1 // pred_region
      %s12 = ssub.s32 128, 128
      %13 = vsyncadd [#allocation3], %s12
      %s15 = sshll.u32 [#allocation2], 4
      %s16 = int_to_ptr.vmem [resolvable:$true] %s15
      %18 = dma.hbm_to_vmem [thread:$0]  %s0, 128, %s16, [#allocation3]
    $region5: #{tpu_custom_call.1} parent=1 // pred_fallthru
      _
    // Predicated region
    $region6: #{tpu_custom_call.1} parent=1 // pred_check
      _
    $region7: #{tpu_custom_call.1} parent=1 // pred_check_branch
      %20 = sbr.rel (0) target = $region9
    $region8: #{tpu_custom_call.1} parent=1 // pred_region
      _
    $region9: #{tpu_custom_call.1} parent=1 // pred_fallthru
      _
    // Predicated region
    $region10: #{tpu_custom_call.1} parent=1 // pred_check
      _
    $region11: #{tpu_custom_call.1} parent=1 // pred_check_branch
      %22 = sbr.rel (0) target = $region13
    $region12: #{tpu_custom_call.1} parent=1 // pred_region
      %23 = dma.done [#allocation3], 128
    $region13: #{tpu_custom_call.1} parent=1 // pred_fallthru
      _
    %v24 = vld [vmem:[#allocation2] sm:$0xff]
    %v25 = vld [vmem:[%s1] sm:$0x1]
    %v27 = vlaneseq
    %v28 = vshrl.u32 %v27, 7
    %v29 = vsub.s32 0, %v28
    %v30 = vrot.slane %v25, %v29
    %v32 = vmul.f32 %v24, %v30
    %vm33 = vcmask 261120
    %v34 = vsel %vm33, %v32, 0.0
    %35 = vadd.xlane.f32.xlu0 %v34
    %v36 = vpop.xlane.xlu0 %35
    %v37 = vrot.slane %v36, 4
    %v38 = vmax.f32 %v36, %v37
    %v39 = vrot.slane %v38, 2
    %v40 = vmax.f32 %v38, %v39
    %v41 = vrot.slane %v40, 1
    %v42 = vmax.f32 %v40, %v41
    %v43 = vsub.f32 %v36, %v42
    %v44 = vmul.f32 %v43, 1.442695
    %v45 = vpow.pop %v44
    %v46 = vrot.slane %v45, 4
    %v47 = vadd.f32 %v45, %v46
    %v48 = vrot.slane %v47, 2
    %v49 = vadd.f32 %v47, %v48
    %v50 = vrot.slane %v49, 1
    %v51 = vadd.f32 %v49, %v50
    %v52 = vrcp.pop %v51
    %v53 = vmul.f32 %v45, %v52
    %v54 = vmul.f32 %v24, %v53
    %55 = vst.msk [vmem:[#allocation5] sm:$0xff] %vm33, %v54
    // Predicated region
    $region14: #{tpu_custom_call.1} parent=1 // pred_check
      _
    $region15: #{tpu_custom_call.1} parent=1 // pred_check_branch
      %57 = sbr.rel (0) target = $region17
    $region16: #{tpu_custom_call.1} parent=1 // pred_region
      %s59 = ssub.s32 128, 128
      %60 = vsyncadd [#allocation4], %s59
      %s62 = sshll.u32 [#allocation5], 4
      %s63 = int_to_ptr.vmem [resolvable:$true] %s62
      %65 = dma.vmem_to_hbm [thread:$0]  %s63, 128, %s2, [#allocation4]
    $region17: #{tpu_custom_call.1} parent=1 // pred_fallthru
      _
    // Predicated region
    $region18: #{tpu_custom_call.1} parent=1 // pred_check
      _
    $region19: #{tpu_custom_call.1} parent=1 // pred_check_branch
      %67 = sbr.rel (0) target = $region21
    $region20: #{tpu_custom_call.1} parent=1 // pred_region
      %68 = dma.done [#allocation4], 128
    $region21: #{tpu_custom_call.1} parent=1 // pred_fallthru
      _
    %69 = vsyncpa [#allocation3], 1
    %70 = vsyncpa [#allocation4], 1

</llo_original>
